<compile_context>
chip_gen: v7x
topology: tpu7x:2x2x1
jax: 0.10.0
libtpu: 0.0.40
codegen_flags: <defaults>
</compile_context>

<pallas_src>
import functools

import jax
import jax.numpy as jnp
from jax.experimental import pallas as pl
from jax.experimental.pallas import tpu as pltpu


_RC_MAX = 512                            # rows per in-kernel compute chunk
_INPUT_VMEM_BUDGET = 20 * 1024 * 1024    # double-buffered input blocks budget
_VMEM_LIMIT_BYTES = 40 * 1024 * 1024     # explicit scoped-VMEM limit (safe on v5e/v6e/v7x)


def _round_up(x, m):
    return ((x + m - 1) // m) * m


def _pick_tiles(batch, feat_dim, itemsize):
    """Rows per grid tile (TB) and rows per in-kernel chunk (RC)."""
    # 2 inputs x 2 pipeline buffers x D x itemsize, plus the lane-padded (TB,1) f32
    # target block: 128 lanes x 4 B = 512 B per row per buffer, x 2 buffers.
    bytes_per_row = 2 * 2 * feat_dim * itemsize + 2 * 128 * 4
    tb = max(8, _INPUT_VMEM_BUDGET // bytes_per_row)
    # Keep >= ~4 grid steps when the batch is large enough so a megacore (v7x) can
    # shard the "parallel" grid axis across both TensorCores.
    tb = min(tb, max(_RC_MAX, _round_up(-(-batch // 4), 8)))
    # Never exceed the (rounded-up) batch.
    tb = min(tb, _round_up(batch, 8))
    if tb >= _RC_MAX:
        tb = (tb // _RC_MAX) * _RC_MAX
        rc = _RC_MAX
    else:
        tb = max(8, (tb // 8) * 8)
        rc = tb
    return tb, rc


def _contrastive_loss_kernel(o1_ref, o2_ref, t_ref, out_ref, *,
                             margin, eps, batch, tile_b, chunk_b, ragged):
    i = pl.program_id(0)
    n_chunks = tile_b // chunk_b

    def chunk_sum(c, acc):
        start = c * chunk_b
        if not isinstance(start, int):
            start = pl.multiple_of(start, chunk_b)

        # Upcast (no-op for f32, halves HBM traffic for bf16 inputs).
        o1c = o1_ref[pl.ds(start, chunk_b), :].astype(jnp.float32)
        o2c = o2_ref[pl.ds(start, chunk_b), :].astype(jnp.float32)
        tc = t_ref[pl.ds(start, chunk_b), :]                         # (RC, 1) f32

        diff = o2c - o1c
        d = jnp.sum(diff * diff, axis=1, keepdims=True)              # (RC, 1)
        hinge = jnp.maximum(margin - jnp.sqrt(d + eps), 0.0)
        losses = 0.5 * (tc * d + (1.0 - tc) * hinge * hinge)         # (RC, 1)

        if ragged:
            # Only generated when B % TB != 0; kills NaN/Inf from overhanging DMA rows.
            row = jax.lax.broadcasted_iota(jnp.int32, (chunk_b, 1), 0)
            remaining = batch - (i * tile_b + c * chunk_b)
            losses = jnp.where(row < remaining, losses, 0.0)

        return acc + jnp.sum(losses)

    if n_chunks == 1:
        total = chunk_sum(0, jnp.float32(0.0))
    else:
        total = jax.lax.fori_loop(0, n_chunks, chunk_sum, jnp.float32(0.0))

    # Lane-dense per-tile partial: every element of this tile's (8,128) output block
    # carries the same partial sum; the wrapper picks one element per tile.
    out_ref[...] = jnp.full((8, 128), total, dtype=jnp.float32)


def contrastive_loss(output1, output2, target, *, margin=1.0, eps=1e-9,
                     size_average=True, tile_b=None):
    """output1, output2: (B, D) float32/bfloat16; target: (B,) {0,1}. Returns scalar f32."""
    B, D = output1.shape
    assert output2.shape == (B, D)
    assert output1.dtype == output2.dtype
    itemsize = jnp.dtype(output1.dtype).itemsize
    t2d = target.astype(jnp.float32).reshape(B, 1)

    if tile_b is None:
        tb, rc = _pick_tiles(B, D, itemsize)
    else:
        tb = int(tile_b)
        assert tb % 8 == 0 and tb > 0
        rc = min(tb, _RC_MAX)
        while tb % rc != 0:
            rc -= 8
    num_tiles = -(-B // tb)
    ragged = (B % tb) != 0

    kernel = functools.partial(
        _contrastive_loss_kernel,
        margin=float(margin), eps=float(eps), batch=B,
        tile_b=tb, chunk_b=rc, ragged=ragged,
    )

    out = pl.pallas_call(
        kernel,
        out_shape=jax.ShapeDtypeStruct((num_tiles * 8, 128), jnp.float32),
        grid=(num_tiles,),
        in_specs=[
            pl.BlockSpec((tb, D), lambda i: (i, 0)),
            pl.BlockSpec((tb, D), lambda i: (i, 0)),
            pl.BlockSpec((tb, 1), lambda i: (i, 0)),
        ],
        out_specs=pl.BlockSpec((8, 128), lambda i: (i, 0)),
        compiler_params=pltpu.CompilerParams(
            dimension_semantics=("parallel",),
            vmem_limit_bytes=_VMEM_LIMIT_BYTES),
        cost_estimate=pl.CostEstimate(
            flops=B * (3 * D + 10),
            transcendentals=B,
            bytes_accessed=2 * B * D * itemsize + 4 * B + num_tiles * 8 * 128 * 4,
        ),
    )(output1, output2, t2d)

    partials = out[0::8, 0]                  # one partial per grid tile
    total = jnp.sum(partials)
    if size_average:
        total = total / jnp.float32(B)
    return total


def _reference(output1, output2, target, margin=1.0, eps=1e-9, size_average=True):
    o1 = output1.astype(jnp.float32)
    o2 = output2.astype(jnp.float32)
    distances = jnp.sum((o2 - o1) ** 2, axis=1)
    t = target.astype(jnp.float32)
    losses = 0.5 * (t * distances
                    + (1.0 - t) * jnp.maximum(margin - jnp.sqrt(distances + eps), 0.0) ** 2)
    return jnp.mean(losses) if size_average else jnp.sum(losses)


if __name__ == "__main__":
    key = jax.random.PRNGKey(0)
    k1, k2, k3 = jax.random.split(key, 3)

    MARGIN = 1.0  # cfg.LOSSES.CONTRASTIVE_LOSS.MARGIN (deterministic in-script)

    # Case 1: tiny single-tile batch (auto tiling).
    o1 = jax.random.normal(k1, (8, 128), dtype=jnp.float32)
    o2 = jax.random.normal(k2, (8, 128), dtype=jnp.float32)
    tg = jax.random.bernoulli(k3, 0.5, (8,)).astype(jnp.int32)
    loss = jax.block_until_ready(contrastive_loss(o1, o2, tg, margin=MARGIN))
    ref = _reference(o1, o2, tg, margin=MARGIN)
    assert jnp.allclose(loss, ref, rtol=1e-5, atol=1e-5), (loss, ref)

    # Case 2: multi-tile grid with a ragged last tile (forced small tile_b).
    o1b = jax.random.normal(k1, (40, 256), dtype=jnp.float32)
    o2b = jax.random.normal(k2, (40, 256), dtype=jnp.float32)
    tgb = jax.random.bernoulli(k3, 0.5, (40,)).astype(jnp.int32)
    loss2 = jax.block_until_ready(contrastive_loss(o1b, o2b, tgb, margin=MARGIN, tile_b=16))
    ref2 = _reference(o1b, o2b, tgb, margin=MARGIN)
    assert jnp.allclose(loss2, ref2, rtol=1e-5, atol=1e-4), (loss2, ref2)

    # Case 3: size_average=False path.
    loss3 = jax.block_until_ready(
        contrastive_loss(o1b, o2b, tgb, margin=MARGIN, size_average=False, tile_b=16))
    ref3 = _reference(o1b, o2b, tgb, margin=MARGIN, size_average=False)
    assert jnp.allclose(loss3, ref3, rtol=1e-5, atol=1e-3), (loss3, ref3)

    # Case 4: multi-chunk inner loop (tile_b > 512) with a ragged last tile.
    o1c = jax.random.normal(k1, (4000, 128), dtype=jnp.float32)
    o2c = jax.random.normal(k2, (4000, 128), dtype=jnp.float32)
    tgc = jax.random.bernoulli(k3, 0.5, (4000,)).astype(jnp.int32)
    loss4 = jax.block_until_ready(contrastive_loss(o1c, o2c, tgc, margin=MARGIN, tile_b=1024))
    ref4 = _reference(o1c, o2c, tgc, margin=MARGIN)
    assert jnp.allclose(loss4, ref4, rtol=1e-5, atol=1e-4), (loss4, ref4)

    # Case 5: bfloat16 embeddings (in-kernel upcast), auto tiling.
    o1d = jax.random.normal(k1, (2048, 128), dtype=jnp.bfloat16)
    o2d = jax.random.normal(k2, (2048, 128), dtype=jnp.bfloat16)
    tgd = jax.random.bernoulli(k3, 0.5, (2048,)).astype(jnp.int32)
    loss5 = jax.block_until_ready(contrastive_loss(o1d, o2d, tgd, margin=MARGIN))
    ref5 = _reference(o1d, o2d, tgd, margin=MARGIN)
    assert jnp.allclose(loss5, ref5, rtol=1e-4, atol=1e-4), (loss5, ref5)

    print("KERNEL_OK")
</pallas_src>

<mosaic_0001>
module attributes {stable_mosaic.version = 11 : i64} {
  func.func @_contrastive_loss_kernel(%arg0: i32, %arg1: memref<8x128xf32, #tpu.memory_space<vmem>>, %arg2: memref<8x128xf32, #tpu.memory_space<vmem>>, %arg3: memref<8x1xf32, #tpu.memory_space<vmem>>, %arg4: memref<8x128xf32, #tpu.memory_space<vmem>>) attributes {dimension_semantics = [#tpu.dimension_semantics<parallel>], iteration_bounds = array<i64: 1>, scalar_prefetch = 0 : i64, scratch_operands = 0 : i64, tpu.core_type = #tpu.core_type<tc>, window_params = [{transform_indices = @transform_0, window_bounds = array<i64: 8, 128>}, {transform_indices = @transform_1, window_bounds = array<i64: 8, 128>}, {transform_indices = @transform_2, window_bounds = array<i64: 8, 1>}, {transform_indices = @transform_3, window_bounds = array<i64: 8, 128>}]} {
    %c0 = arith.constant 0 : index
    %c0_0 = arith.constant 0 : index
    %0 = vector.load %arg1[%c0, %c0_0] : memref<8x128xf32, #tpu.memory_space<vmem>>, vector<8x128xf32>
    %c0_1 = arith.constant 0 : index
    %c0_2 = arith.constant 0 : index
    %1 = vector.load %arg2[%c0_1, %c0_2] : memref<8x128xf32, #tpu.memory_space<vmem>>, vector<8x128xf32>
    %c0_3 = arith.constant 0 : index
    %c0_4 = arith.constant 0 : index
    %2 = vector.load %arg3[%c0_3, %c0_4] : memref<8x1xf32, #tpu.memory_space<vmem>>, vector<8x1xf32>
    %3 = arith.subf %1, %0 : vector<8x128xf32>
    %4 = arith.mulf %3, %3 : vector<8x128xf32>
    %cst = arith.constant dense<0.000000e+00> : vector<8xf32>
    %5 = vector.multi_reduction <add>, %4, %cst [1] : vector<8x128xf32> to vector<8xf32>
    %6 = vector.shape_cast %5 : vector<8xf32> to vector<8x1xf32>
    %cst_5 = arith.constant 9.99999971E-10 : f32
    %7 = vector.broadcast %cst_5 : f32 to vector<8x1xf32>
    %8 = arith.addf %6, %7 : vector<8x1xf32>
    %9 = math.sqrt %8 : vector<8x1xf32>
    %cst_6 = arith.constant 1.000000e+00 : f32
    %10 = vector.broadcast %cst_6 : f32 to vector<8x1xf32>
    %11 = arith.subf %10, %9 : vector<8x1xf32>
    %cst_7 = arith.constant 0.000000e+00 : f32
    %12 = vector.broadcast %cst_7 : f32 to vector<8x1xf32>
    %13 = arith.maximumf %11, %12 : vector<8x1xf32>
    %14 = arith.mulf %2, %6 : vector<8x1xf32>
    %cst_8 = arith.constant 1.000000e+00 : f32
    %15 = vector.broadcast %cst_8 : f32 to vector<8x1xf32>
    %16 = arith.subf %15, %2 : vector<8x1xf32>
    %17 = arith.mulf %16, %13 : vector<8x1xf32>
    %18 = arith.mulf %17, %13 : vector<8x1xf32>
    %19 = arith.addf %14, %18 : vector<8x1xf32>
    %cst_9 = arith.constant 5.000000e-01 : f32
    %20 = vector.broadcast %cst_9 : f32 to vector<8x1xf32>
    %21 = arith.mulf %20, %19 : vector<8x1xf32>
    %22 = vector.shape_cast %21 : vector<8x1xf32> to vector<1x8x1xf32>
    %cst_10 = arith.constant dense<0.000000e+00> : vector<1xf32>
    %23 = vector.multi_reduction <add>, %22, %cst_10 [1, 2] : vector<1x8x1xf32> to vector<1xf32>
    %24 = vector.shape_cast %23 : vector<1xf32> to vector<1x1x1xf32>
    %25 = vector.extract %24[0, 0, 0] : f32 from vector<1x1x1xf32>
    %cst_11 = arith.constant 0.000000e+00 : f32
    %26 = arith.addf %cst_11, %25 : f32
    %27 = vector.broadcast %26 : f32 to vector<8x128xf32>
    %c0_12 = arith.constant 0 : index
    %c0_13 = arith.constant 0 : index
    %28 = vector.load %arg4[%c0_12, %c0_13] : memref<8x128xf32, #tpu.memory_space<vmem>>, vector<8x128xf32>
    tpu.vector_store %arg4[%c0_12, %c0_13], %27 {strides = array<i32>} : memref<8x128xf32, #tpu.memory_space<vmem>>, vector<8x128xf32>,
    return
  }
  func.func @transform_0(%arg0: i32) -> (i32, i32) {
    %c0_i32 = arith.constant 0 : i32
    %c0_i32_0 = arith.constant 0 : i32
    return %arg0, %c0_i32 : i32, i32
  }
  func.func @transform_1(%arg0: i32) -> (i32, i32) {
    %c0_i32 = arith.constant 0 : i32
    %c0_i32_0 = arith.constant 0 : i32
    return %arg0, %c0_i32 : i32, i32
  }
  func.func @transform_2(%arg0: i32) -> (i32, i32) {
    %c0_i32 = arith.constant 0 : i32
    %c0_i32_0 = arith.constant 0 : i32
    return %arg0, %c0_i32 : i32, i32
  }
  func.func @transform_3(%arg0: i32) -> (i32, i32) {
    %c0_i32 = arith.constant 0 : i32
    %c0_i32_0 = arith.constant 0 : i32
    return %arg0, %c0_i32 : i32, i32
  }
}

</mosaic_0001>

<llo_original>
// kernel: tpu_custom_call.1
$region0: #{tpu_custom_call.1}
  #allocation0 [shape = 'u32[]', space=smem, size = 0x4, offset = 0x4, fixed_abs, tag = 'smem constant byte address 0x4 - core index']
  #allocation1 [shape = 'u32[144,128]{1,0:T(1,128)}', space=vmem, size = 0x12000, scoped, tag = 'internal scratch']
  %s0 = inlined_call_operand.vmem [shape: f32[8,128], index: 0, kind: input, shape index: {}]
  %s1 = inlined_call_operand.hbm [shape: f32[8,128], index: 1, kind: input, shape index: {}]
  %s2 = inlined_call_operand.vmem [shape: f32[8,1], index: 2, kind: input, shape index: {}]
  %s3 = inlined_call_operand.hbm [shape: f32[8,128], index: 3, kind: output, shape index: {}]
  %s4 = sld [smem:[#allocation0]]
  $region26: #{tpu_custom_call.1} parent=0
    _
  %s6 = ssub.s32 1, %s4
  %s7 = scalar_select 0, %s6, %s4
  $region1: #{tpu_custom_call.1} parent=0
    #allocation2 [shape = 'u8[4096]{0}', space=vmem, size = 0x1000, scoped, tag = 'input window, operand 1, single buffered']
    #allocation3 [shape = 's32[1]{0}', space=sflag, size = 0x4, scoped, tag = 'scoped memory for tpu_custom_call.1']
    #allocation4 [shape = 's32[1]{0}', space=sflag, size = 0x4, scoped, tag = 'scoped memory for tpu_custom_call.1']
    #allocation5 [shape = 'u8[4096]{0}', space=vmem, size = 0x1000, scoped, tag = 'output window, operand 0, single buffered']
    %8 = vsyncpa [#allocation3], 0
    %9 = vsyncpa [#allocation4], 0
    // Predicated region
    $region2: #{tpu_custom_call.1} parent=1 // pred_check
      _
    $region3: #{tpu_custom_call.1} parent=1 // pred_check_branch
      %11 = sbr.rel (0) target = $region5
    $region4: #{tpu_custom_call.1} parent=1 // pred_region
      _
    $region5: #{tpu_custom_call.1} parent=1 // pred_fallthru
      _
    // Predicated region
    $region6: #{tpu_custom_call.1} parent=1 // pred_check
      _
    $region7: #{tpu_custom_call.1} parent=1 // pred_check_branch
      %13 = sbr.rel (0) target = $region9
    $region8: #{tpu_custom_call.1} parent=1 // pred_region
      %s15 = ssub.s32 128, 128
      %16 = vsyncadd [#allocation3], %s15
      %s18 = sshll.u32 [#allocation2], 4
      %s19 = int_to_ptr.vmem [resolvable:$true] %s18
      %21 = dma.hbm_to_vmem [thread:$0]  %s1, 128, %s19, [#allocation3]
    $region9: #{tpu_custom_call.1} parent=1 // pred_fallthru
      _
    // Predicated region
    $region10: #{tpu_custom_call.1} parent=1 // pred_check
      _
    $region11: #{tpu_custom_call.1} parent=1 // pred_check_branch
      %23 = sbr.rel (0) target = $region13
    $region12: #{tpu_custom_call.1} parent=1 // pred_region
      _
    $region13: #{tpu_custom_call.1} parent=1 // pred_fallthru
      _
    // Predicated region
    $region14: #{tpu_custom_call.1} parent=1 // pred_check
      _
    $region15: #{tpu_custom_call.1} parent=1 // pred_check_branch
      %25 = sbr.rel (0) target = $region17
    $region16: #{tpu_custom_call.1} parent=1 // pred_region
      %26 = dma.done [#allocation3], 128
    $region17: #{tpu_custom_call.1} parent=1 // pred_fallthru
      _
    %v27 = vld [vmem:[%s0] sm:$0xff]
    %v28 = vld [vmem:[#allocation2] sm:$0xff]
    %v29 = vld [vmem:[%s2] sm:$0xff]
    %v30 = vsub.f32 %v28, %v27
    %v31 = vmul.f32 %v30, %v30
    %32 = vadd.xlane.f32.xlu0 %v31
    %v33 = vpop.xlane.xlu0 %32
    %v34 = vadd.f32 %v33, 1e-09
    %v35 = vrsqrt.pop %v34
    %v36 = vmul.f32 %v34, %v35
    %vm37 = vcmp.eq.f32.partialorder %v34, inf
    %v38 = vsel %vm37, %v34, %v36
    %vm39 = vcmp.eq.f32.partialorder %v34, 0.0
    %v40 = vand.u32 %v34, 2147483648
    %v41 = vsel %vm39, %v40, %v38
    %v42 = vsub.f32 1.0, %v41
    %v43 = vmax.f32 %v42, 0.0
    %v44 = vmul.f32 %v29, %v33
    %v45 = vsub.f32 1.0, %v29
    %v46 = vmul.f32 %v45, %v43
    %v47 = vmul.f32 %v46, %v43
    %v48 = vadd.f32 %v44, %v47
    %v49 = vmul.f32 %v48, 0.5
    %vm50 = vcmask 7168
    %v51 = vsel %vm50, %v49, 0.0
    %52 = vadd.xlane.f32.xlu0 %v51
    %v53 = vpop.xlane.xlu0 %52
    %v54 = vrot.slane %v53, 4
    %v55 = vadd.f32 %v53, %v54
    %v56 = vrot.slane %v55, 2
    %v57 = vadd.f32 %v55, %v56
    %v58 = vrot.slane %v57, 1
    %v59 = vadd.f32 %v57, %v58
    %s60 = vtos %v59
    %s61 = sadd.f32 %s60, 0.0
    %v62 = vstv %s61
    %63 = vst [vmem:[#allocation5] sm:$0xff] %v62
    // Predicated region
    $region18: #{tpu_custom_call.1} parent=1 // pred_check
      _
    $region19: #{tpu_custom_call.1} parent=1 // pred_check_branch
      %65 = sbr.rel (0) target = $region21
    $region20: #{tpu_custom_call.1} parent=1 // pred_region
      %s67 = ssub.s32 128, 128
      %68 = vsyncadd [#allocation4], %s67
      %s70 = sshll.u32 [#allocation5], 4
      %s71 = int_to_ptr.vmem [resolvable:$true] %s70
      %73 = dma.vmem_to_hbm [thread:$0]  %s71, 128, %s3, [#allocation4]
    $region21: #{tpu_custom_call.1} parent=1 // pred_fallthru
      _
    // Predicated region
    $region22: #{tpu_custom_call.1} parent=1 // pred_check
      _
    $region23: #{tpu_custom_call.1} parent=1 // pred_check_branch
      %75 = sbr.rel (0) target = $region25
    $region24: #{tpu_custom_call.1} parent=1 // pred_region
      %76 = dma.done [#allocation4], 128
    $region25: #{tpu_custom_call.1} parent=1 // pred_fallthru
      _
    %77 = vsyncpa [#allocation3], 1
    %78 = vsyncpa [#allocation4], 1

</llo_original>
